<compile_context>
chip_gen: v5e
topology: v5e:2x2
jax: 0.10.0
libtpu: 0.0.40
codegen_flags: <defaults>
</compile_context>

<pallas_src>
import math

import jax
import jax.numpy as jnp
from jax import lax
from jax.experimental import pallas as pl
from jax.experimental.pallas import tpu as pltpu

_LANE = 128
_MAX_GROUPS = 32          # cap on unrolled lane-groups per grid step (<= 4096 lanes)


def _fold_factor(c_in, hw, itemsize):
    """Sublane fold so C_in*fold fills a vreg's sublanes for this dtype."""
    packing = max(8, 32 // int(itemsize))       # 8 for f32, 16 for bf16, 32 for int8
    fold = packing // math.gcd(c_in, packing)   # power of two
    fold = math.gcd(fold, hw)                   # must divide H*W exactly
    return max(int(fold), 1)


def _vmem_capacity_bytes():
    try:
        cap = int(getattr(pltpu.get_tpu_info(), "vmem_capacity_bytes", 0))
        if cap > 0:
            return cap
    except Exception:
        pass
    return 64 << 20   # conservative default: assume v7x-class (64 MiB physical)


def _padded_bytes(rows, cols, itemsize):
    """(8,128)-padded footprint estimate of a 2-D VMEM block."""
    return (-(-rows // 8) * 8) * (-(-cols // _LANE) * _LANE) * itemsize


def _make_gap_kernel(t_hw, hw_f, n_blocks, group):
    n_groups = -(-t_hw // group)
    rem = hw_f - (n_blocks - 1) * t_hw          # valid lanes in the last HW tile
    ragged = rem != t_hw

    def tile_partial(x_ref, valid_len):
        """f32 partial sum over the tile's lane groups — pure lane-wise VPU adds."""
        part = None
        for g in range(n_groups):
            lo = g * group
            if lo >= valid_len:
                break                            # fully-invalid groups: skip (static)
            xg = x_ref[:, :, lo:lo + group].astype(jnp.float32)
            take = valid_len - lo
            if take < group:                     # statically-masked boundary group
                lane = lax.broadcasted_iota(jnp.int32, xg.shape, 2)
                xg = jnp.where(lane < take, xg, 0.0)
            part = xg if part is None else part + xg
        return part

    def kernel(x_ref, w_ref, b_ref, o_ref, acc_ref):
        h = pl.program_id(1)
        last = pl.num_programs(1) - 1

        @pl.when(h == 0)
        def _init():
            acc_ref[...] = jnp.zeros_like(acc_ref)

        if ragged:
            @pl.when(h < last)
            def _body():
                acc_ref[...] += tile_partial(x_ref, t_hw)

            @pl.when(h == last)
            def _tail():
                acc_ref[...] += tile_partial(x_ref, rem)
        else:
            acc_ref[...] += tile_partial(x_ref, t_hw)

        @pl.when(h == last)
        def _finalize():
            # One cross-lane reduce per batch element, then the fused 1x1 conv.
            s = jnp.sum(acc_ref[...], axis=-1)                           # (1, C_fold)
            y = jnp.dot(s, w_ref[...], preferred_element_type=jnp.float32)
            o_ref[0] = (y + b_ref[...]).astype(o_ref.dtype)

    return kernel


def prepare_params(weight, bias, hw_shape, x_dtype):
    """One-time (hoisted) conv-param preprocessing: transpose, 1/(H*W) scale,
    sublane-fold expansion, f32 cast.  Precompute once at parameter-load time."""
    H, W = hw_shape
    hw = H * W
    w2 = weight.reshape(weight.shape[0], -1)                 # (C_out, C_in)
    C_out, C_in = w2.shape
    fold = _fold_factor(C_in, hw, jnp.dtype(x_dtype).itemsize)
    w_eff = jnp.repeat(w2.astype(jnp.float32).T / float(hw), fold, axis=0)  # (C_fold, C_out)
    b2 = bias.astype(jnp.float32).reshape(1, C_out)
    return w_eff, b2


def global_average_pool_2d(x, w_eff, b2, *, block_budget_bytes=None):
    """x: (N, C_in, H, W);  (w_eff, b2) from prepare_params.  -> (N, C_out, 1, 1)."""
    N, C_in, H, W = x.shape
    HW = H * W
    itemsize = jnp.dtype(x.dtype).itemsize
    fold = _fold_factor(C_in, HW, itemsize)
    C_fold = C_in * fold
    HW_f = HW // fold
    if w_eff.shape[0] != C_fold:
        raise ValueError("w_eff was prepared for a different input shape/dtype")
    C_out = w_eff.shape[1]

    x3 = x.reshape(N, C_fold, HW_f)            # free row-major reshape

    # ---- generation-aware VMEM budgeting (never exceed physical VMEM) -------
    vmem_cap = _vmem_capacity_bytes()
    if vmem_cap >= (96 << 20):                 # v5e / v6e: 128 MiB physical
        vmem_ceiling = 96 << 20
        default_block_budget = 8 << 20
    else:                                      # v7x-class: 64 MiB physical
        vmem_ceiling = min((vmem_cap * 3) // 4, 48 << 20)
        default_block_budget = 4 << 20
    if block_budget_bytes is None:
        block_budget_bytes = default_block_budget

    # Conv weight + bias stay VMEM-resident (double-buffered); reserve for them.
    w_resident = 2 * (_padded_bytes(C_fold, C_out, 4) + _padded_bytes(1, C_out, 4))
    stream_budget = min(block_budget_bytes,
                        max(vmem_ceiling - w_resident - (4 << 20), 1 << 20) // 2)

    # ---- HW tile: multiple of 128 lanes; ragged last tile masked in-kernel --
    if HW_f <= _LANE:
        t_hw = HW_f
        group = HW_f
    else:
        budget_lanes = (stream_budget // max(C_fold * itemsize, 1)) // _LANE * _LANE
        t_hw = int(max(_LANE, min(budget_lanes, _MAX_GROUPS * _LANE,
                                  (HW_f // _LANE) * _LANE)))
        group = _LANE
    n_blocks = pl.cdiv(HW_f, t_hw)

    block_bytes = _padded_bytes(C_fold, t_hw, itemsize)
    acc_bytes = _padded_bytes(C_fold, group, 4)
    need = 2 * block_bytes + w_resident + acc_bytes + (4 << 20)
    vmem_limit = int(min(vmem_ceiling, max(need, 32 << 20)))

    kernel = _make_gap_kernel(t_hw, HW_f, n_blocks, group)

    out = pl.pallas_call(
        kernel,
        out_shape=jax.ShapeDtypeStruct((N, 1, C_out), x.dtype),
        grid_spec=pltpu.PrefetchScalarGridSpec(
            num_scalar_prefetch=0,
            grid=(N, n_blocks),
            in_specs=[
                pl.BlockSpec((1, C_fold, t_hw), lambda n, h: (n, 0, h)),
                pl.BlockSpec((C_fold, C_out), lambda n, h: (0, 0)),
                pl.BlockSpec((1, C_out), lambda n, h: (0, 0)),
            ],
            out_specs=pl.BlockSpec((1, 1, C_out), lambda n, h: (n, 0, 0)),
            scratch_shapes=[pltpu.VMEM((1, C_fold, group), jnp.float32)],
        ),
        compiler_params=pltpu.CompilerParams(
            dimension_semantics=("parallel", "arbitrary"),
            vmem_limit_bytes=vmem_limit,
        ),
    )(x3, w_eff, b2)

    return out.reshape(N, C_out, 1, 1)


def init_params(key, in_ch, out_ch, dtype=jnp.float32):
    """Deterministic init mimicking PyTorch Conv2d defaults (kaiming uniform, a=sqrt(5))."""
    kw, kb = jax.random.split(key)
    fan_in = in_ch * 1 * 1
    bound = 1.0 / math.sqrt(fan_in)
    weight = jax.random.uniform(kw, (out_ch, in_ch), dtype, minval=-bound, maxval=bound)
    bias = jax.random.uniform(kb, (out_ch,), dtype, minval=-bound, maxval=bound)
    return weight, bias


if __name__ == "__main__":
    N, C_in, C_out, H, W = 2, 4, 8, 16, 16

    key = jax.random.PRNGKey(0)
    kx, kp = jax.random.split(key)
    x = jax.random.normal(kx, (N, C_in, H, W), dtype=jnp.float32)
    weight, bias = init_params(kp, C_in, C_out)

    # One-time (hoisted) conv-weight preprocessing — amortized across calls.
    w_eff, b2 = prepare_params(weight, bias, (H, W), x.dtype)

    y = global_average_pool_2d(x, w_eff, b2)
    y = jax.block_until_ready(y)

    # Pure-JAX reference (global avg pool + 1x1 conv).
    pooled_ref = jnp.mean(x, axis=(2, 3))                      # (N, C_in)
    y_ref = (pooled_ref @ weight.T + bias)[:, :, None, None]   # (N, C_out, 1, 1)
    assert y.shape == (N, C_out, 1, 1), y.shape
    assert jnp.allclose(y, y_ref, atol=1e-5, rtol=1e-5), "mismatch vs reference"

    print("KERNEL_OK")
</pallas_src>

<mosaic_0001>
module attributes {stable_mosaic.version = 11 : i64} {
  func.func @kernel(%arg0: i32, %arg1: i32, %arg2: memref<1x8x128xf32, #tpu.memory_space<vmem>>, %arg3: memref<8x8xf32, #tpu.memory_space<vmem>>, %arg4: memref<1x8xf32, #tpu.memory_space<vmem>>, %arg5: memref<1x1x8xf32, #tpu.memory_space<vmem>>, %arg6: memref<1x8x128xf32, #tpu.memory_space<vmem>>) attributes {dimension_semantics = [#tpu.dimension_semantics<parallel>, #tpu.dimension_semantics<arbitrary>], iteration_bounds = array<i64: 2, 1>, scalar_prefetch = 0 : i64, scratch_operands = 1 : i64, tpu.core_type = #tpu.core_type<tc>, window_params = [{transform_indices = @transform_0, window_bounds = array<i64: 1, 8, 128>}, {pipeline_mode = #tpu.pipeline_mode<synchronous>, transform_indices = @transform_1, window_bounds = array<i64: 8, 8>}, {pipeline_mode = #tpu.pipeline_mode<synchronous>, transform_indices = @transform_2, window_bounds = array<i64: 1, 8>}, {transform_indices = @transform_3, window_bounds = array<i64: 1, 1, 8>}]} {
    %c0_i32 = arith.constant 0 : i32
    %0 = arith.cmpi eq, %arg1, %c0_i32 : i32
    %1 = arith.extui %0 : i1 to i32
    %c0_i32_0 = arith.constant 0 : i32
    %2 = arith.cmpi ne, %1, %c0_i32_0 : i32
    scf.if %2 {
      %cst = arith.constant 0.000000e+00 : f32
      %10 = vector.broadcast %cst : f32 to vector<1x8x128xf32>
      %c0_11 = arith.constant 0 : index
      %c0_12 = arith.constant 0 : index
      %c0_13 = arith.constant 0 : index
      %11 = vector.load %arg6[%c0_11, %c0_12, %c0_13] : memref<1x8x128xf32, #tpu.memory_space<vmem>>, vector<1x8x128xf32>
      tpu.vector_store %arg6[%c0_11, %c0_12, %c0_13], %10 {strides = array<i32>} : memref<1x8x128xf32, #tpu.memory_space<vmem>>, vector<1x8x128xf32>,
    } else {
    }
    %c0 = arith.constant 0 : index
    %c0_1 = arith.constant 0 : index
    %c0_2 = arith.constant 0 : index
    %3 = vector.load %arg6[%c0, %c0_1, %c0_2] : memref<1x8x128xf32, #tpu.memory_space<vmem>>, vector<1x8x128xf32>
    %c0_3 = arith.constant 0 : index
    %c0_4 = arith.constant 0 : index
    %c0_5 = arith.constant 0 : index
    %4 = vector.load %arg2[%c0_3, %c0_4, %c0_5] : memref<1x8x128xf32, #tpu.memory_space<vmem>>, vector<1x8x128xf32>
    %5 = arith.addf %3, %4 : vector<1x8x128xf32>
    %c0_6 = arith.constant 0 : index
    %c0_7 = arith.constant 0 : index
    %c0_8 = arith.constant 0 : index
    %6 = vector.load %arg6[%c0_6, %c0_7, %c0_8] : memref<1x8x128xf32, #tpu.memory_space<vmem>>, vector<1x8x128xf32>
    tpu.vector_store %arg6[%c0_6, %c0_7, %c0_8], %5 {strides = array<i32>} : memref<1x8x128xf32, #tpu.memory_space<vmem>>, vector<1x8x128xf32>,
    %c0_i32_9 = arith.constant 0 : i32
    %7 = arith.cmpi eq, %arg1, %c0_i32_9 : i32
    %8 = arith.extui %7 : i1 to i32
    %c0_i32_10 = arith.constant 0 : i32
    %9 = arith.cmpi ne, %8, %c0_i32_10 : i32
    scf.if %9 {
      %c0_11 = arith.constant 0 : index
      %c0_12 = arith.constant 0 : index
      %c0_13 = arith.constant 0 : index
      %10 = vector.load %arg6[%c0_11, %c0_12, %c0_13] : memref<1x8x128xf32, #tpu.memory_space<vmem>>, vector<1x8x128xf32>
      %cst = arith.constant dense<0.000000e+00> : vector<1x8xf32>
      %11 = vector.multi_reduction <add>, %10, %cst [2] : vector<1x8x128xf32> to vector<1x8xf32>
      %c0_14 = arith.constant 0 : index
      %c0_15 = arith.constant 0 : index
      %12 = vector.load %arg3[%c0_14, %c0_15] : memref<8x8xf32, #tpu.memory_space<vmem>>, vector<8x8xf32>
      %cst_16 = arith.constant dense<0.000000e+00> : vector<1x8xf32>
      %13 = tpu.matmul %11, %12, %cst_16 {dimension_numbers = #tpu.dot_dimension_numbers<[1], [0], [0], [1], [0, 0, 1, 1], [], []>} : vector<1x8xf32>, vector<8x8xf32>, vector<1x8xf32> -> vector<1x8xf32>
      %c0_17 = arith.constant 0 : index
      %c0_18 = arith.constant 0 : index
      %14 = vector.load %arg4[%c0_17, %c0_18] : memref<1x8xf32, #tpu.memory_space<vmem>>, vector<1x8xf32>
      %15 = arith.addf %13, %14 : vector<1x8xf32>
      %c0_19 = arith.constant 0 : index
      %c0_20 = arith.constant 0 : index
      %c0_21 = arith.constant 0 : index
      %16 = vector.load %arg5[%c0_19, %c0_20, %c0_21] : memref<1x1x8xf32, #tpu.memory_space<vmem>>, vector<1x1x8xf32>
      %17 = vector.shape_cast %16 : vector<1x1x8xf32> to vector<1x8xf32>
      %18 = vector.shape_cast %15 : vector<1x8xf32> to vector<1x1x8xf32>
      tpu.vector_store %arg5[%c0_19, %c0_20, %c0_21], %18 {strides = array<i32>} : memref<1x1x8xf32, #tpu.memory_space<vmem>>, vector<1x1x8xf32>,
    } else {
    }
    return
  }
  func.func @transform_0(%arg0: i32, %arg1: i32) -> (i32, i32, i32) {
    %c0_i32 = arith.constant 0 : i32
    %c0_i32_0 = arith.constant 0 : i32
    return %arg0, %c0_i32, %arg1 : i32, i32, i32
  }
  func.func @transform_1(%arg0: i32, %arg1: i32) -> (i32, i32) {
    %c0_i32 = arith.constant 0 : i32
    %c0_i32_0 = arith.constant 0 : i32
    %c0_i32_1 = arith.constant 0 : i32
    return %c0_i32, %c0_i32_0 : i32, i32
  }
  func.func @transform_2(%arg0: i32, %arg1: i32) -> (i32, i32) {
    %c0_i32 = arith.constant 0 : i32
    %c0_i32_0 = arith.constant 0 : i32
    %c0_i32_1 = arith.constant 0 : i32
    return %c0_i32, %c0_i32_0 : i32, i32
  }
  func.func @transform_3(%arg0: i32, %arg1: i32) -> (i32, i32, i32) {
    %c0_i32 = arith.constant 0 : i32
    %c0_i32_0 = arith.constant 0 : i32
    %c0_i32_1 = arith.constant 0 : i32
    return %arg0, %c0_i32, %c0_i32_0 : i32, i32, i32
  }
}

</mosaic_0001>

<llo_original>
// kernel: tpu_custom_call.1
$region0: #{tpu_custom_call.1}
  #allocation0 [shape = 'u32[]', space=smem, size = 0x4, offset = 0x4, fixed_abs, tag = 'smem constant byte address 0x4 - core index']
  #allocation1 [shape = 'u32[72,128]{1,0:T(1,128)}', space=vmem, size = 0x9000, scoped, tag = 'internal scratch']
  #allocation2 [shape = 'f32[1,8,128]{2,1,0:T(8,128)}', space=vmem, size = 0x1000, scoped, tag = 'scratch operand']
  %s0 = inlined_call_operand.hbm [shape: f32[2,8,128], index: 0, kind: input, shape index: {}]
  %s1 = inlined_call_operand.hbm [shape: f32[8,8], index: 1, kind: input, shape index: {}]
  %s2 = inlined_call_operand.vmem [shape: f32[1,8], index: 2, kind: input, shape index: {}]
  %s3 = inlined_call_operand.hbm [shape: f32[2,1,8], index: 3, kind: output, shape index: {}]
  %s4 = sld [smem:[#allocation0]]
  $region61: #{tpu_custom_call.1} parent=0
    _
  %s6 = ssub.s32 1, %s4
  %s7 = scalar_select 0, %s6, %s4
  $region1: #{tpu_custom_call.1} parent=0
    #allocation3 [shape = 'u8[8192]{0}', space=vmem, size = 0x2000, scoped, tag = 'input window, operand 0']
    #allocation4 [shape = 's32[2]{0}', space=sflag, size = 0x8, scoped, tag = 'scoped memory for tpu_custom_call.1']
    #allocation5 [shape = 's32[2]{0}', space=sflag, size = 0x8, scoped, tag = 'scoped memory for tpu_custom_call.1']
    #allocation6 [shape = 'u8[4096]{0}', space=vmem, size = 0x1000, scoped, tag = 'input window, operand 1, single buffered']
    #allocation7 [shape = 's32[1]{0}', space=sflag, size = 0x4, scoped, tag = 'scoped memory for tpu_custom_call.1']
    #allocation8 [shape = 'u8[1024]{0}', space=vmem, size = 0x400, scoped, tag = 'output window, operand 0']
    %8 = vsyncpa [#allocation4], 0
    %s9 = scalar_lea.sflag [#allocation4], 1
    %10 = vsyncpa %s9, 0
    %11 = vsyncpa [#allocation7], 0
    %12 = vsyncpa [#allocation5], 0
    %s13 = scalar_lea.sflag [#allocation5], 1
    %14 = vsyncpa %s13, 0
    loop: start=0, step=1, limit=4
    $region2: #{tpu_custom_call.1} parent=1 // loop_pre_header
      _
    $region3: #{tpu_custom_call.1} parent=1 // loop_header
      %s16 = sphi 0, %s20
      %p17 = scmp.ge.s32.totalorder %s16, 4
      %s23 = sphi 0, %s35
      %s24 = sphi 0, %s31
      %s25 = sphi 0, %s23
      %s26 = sphi 0, %s24
      %s27 = sphi 0, %s25
      %s28 = sphi 0, %s26
      %s40 = sphi 0, %s42
      %s43 = sphi 0, %s40
      %s44 = sphi 0, %s43
      %s60 = sphi 0, %s44
      %s64 = sphi 0, %s64
      %s66 = sphi 0, %s64
      %s67 = sphi 0, %s66
      %s81 = sphi 0, %s67
      %s85 = sphi 0, %s85
      %s87 = sphi 0, %s85
      %s88 = sphi 0, %s87
      %s102 = sphi 0, %s88
      %s108 = sphi 0, %s110
      %s111 = sphi 0, %s108
      %s112 = sphi 0, %s111
      %s128 = sphi 0, %s112
    $region4: #{tpu_custom_call.1} parent=1 // loop_header_branch
      %19 = sbr.rel (%p17) target = $region8
    $region5: #{tpu_custom_call.1} parent=1 // loop_body
      %s21 = ssub.s32 %s16, 1
      %s22 = ssub.s32 %s16, 2
      %s29 = sadd.s32 1, %s24
      %p30 = scmp.ge.s32.totalorder %s29, 1
      %s31 = scalar_select %p30, 0, %s29
      %s32 = sadd.s32 1, %s23
      %s33 = scalar_select %p30, %s32, %s23
      %p34 = scmp.ge.s32.totalorder %s33, 2
      %s35 = scalar_select %p34, 0, %s33
      %s36 = ssub.s32 %s23, %s35
      %s37 = ssub.s32 %s24, %s31
      %s38 = sor.u32 %s36, %s37
      %p39 = scmp.eq.s32.totalorder %s38, 0
      %s41 = sadd.s32 %s40, 1
      %s42 = scalar_select %p39, %s40, %s41
      %p45 = pneg %p39
      %p46 = scmp.eq.s32.totalorder %s16, 1
      %p47 = por %p45, %p46
      %p48 = scmp.ne.s32.totalorder %s40, %s43
      %p49 = scmp.eq.s32.totalorder %s16, 0
      %p50 = por %p48, %p49
      %p51 = scmp.ne.s32.totalorder %s40, %s43
      %p52 = scmp.eq.s32.totalorder %s21, 1
      %p53 = por %p51, %p52
      %p54 = scmp.ne.s32.totalorder %s43, %s44
      %p55 = scmp.eq.s32.totalorder %s21, 0
      %p56 = por %p54, %p55
      %p57 = scmp.ne.s32.totalorder %s43, %s44
      %p58 = scmp.eq.s32.totalorder %s22, 1
      %p59 = por %p57, %p58
      %p61 = scmp.ne.s32.totalorder %s44, %s60
      %p62 = scmp.eq.s32.totalorder %s22, 0
      %p63 = por %p61, %p62
      %s65 = sadd.s32 %s64, 1
      %p68 = scmp.eq.s32.totalorder %s16, 1
      %p69 = scmp.ne.s32.totalorder %s64, %s66
      %p70 = scmp.eq.s32.totalorder %s16, 0
      %p71 = por %p69, %p70
      %p72 = scmp.ne.s32.totalorder %s64, %s66
      %p73 = scmp.eq.s32.totalorder %s21, 1
      %p74 = por %p72, %p73
      %p75 = scmp.ne.s32.totalorder %s66, %s67
      %p76 = scmp.eq.s32.totalorder %s21, 0
      %p77 = por %p75, %p76
      %p78 = scmp.ne.s32.totalorder %s66, %s67
      %p79 = scmp.eq.s32.totalorder %s22, 1
      %p80 = por %p78, %p79
      %p82 = scmp.ne.s32.totalorder %s67, %s81
      %p83 = scmp.eq.s32.totalorder %s22, 0
      %p84 = por %p82, %p83
      %s86 = sadd.s32 %s85, 1
      %p89 = scmp.eq.s32.totalorder %s16, 1
      %p90 = scmp.ne.s32.totalorder %s85, %s87
      %p91 = scmp.eq.s32.totalorder %s16, 0
      %p92 = por %p90, %p91
      %p93 = scmp.ne.s32.totalorder %s85, %s87
      %p94 = scmp.eq.s32.totalorder %s21, 1
      %p95 = por %p93, %p94
      %p96 = scmp.ne.s32.totalorder %s87, %s88
      %p97 = scmp.eq.s32.totalorder %s21, 0
      %p98 = por %p96, %p97
      %p99 = scmp.ne.s32.totalorder %s87, %s88
      %p100 = scmp.eq.s32.totalorder %s22, 1
      %p101 = por %p99, %p100
      %p103 = scmp.ne.s32.totalorder %s88, %s102
      %p104 = scmp.eq.s32.totalorder %s22, 0
      %p105 = por %p103, %p104
      %s106 = ssub.s32 %s23, %s35
      %p107 = scmp.eq.s32.totalorder %s106, 0
      %s109 = sadd.s32 %s108, 1
      %s110 = scalar_select %p107, %s108, %s109
      %p113 = pneg %p107
      %p114 = scmp.eq.s32.totalorder %s16, 1
      %p115 = por %p113, %p114
      %p116 = scmp.ne.s32.totalorder %s108, %s111
      %p117 = scmp.eq.s32.totalorder %s16, 0
      %p118 = por %p116, %p117
      %p119 = scmp.ne.s32.totalorder %s108, %s111
      %p120 = scmp.eq.s32.totalorder %s21, 1
      %p121 = por %p119, %p120
      %p122 = scmp.ne.s32.totalorder %s111, %s112
      %p123 = scmp.eq.s32.totalorder %s21, 0
      %p124 = por %p122, %p123
      %p125 = scmp.ne.s32.totalorder %s111, %s112
      %p126 = scmp.eq.s32.totalorder %s22, 1
      %p127 = por %p125, %p126
      %p129 = scmp.ne.s32.totalorder %s112, %s128
      %p130 = scmp.eq.s32.totalorder %s22, 0
      %p131 = por %p129, %p130
      %p132 = scmp.le.s32.totalorder 1, %s16
      %p133 = scmp.lt.s32.totalorder %s16, 3
      %p134 = pnand %p132, %p133
      %p135 = pneg %p134
      // Predicated region
      $region9: #{tpu_custom_call.1} parent=5 // pred_check
        _
      $region10: #{tpu_custom_call.1} parent=5 // pred_check_branch
        %137 = sbr.rel (%p134) target = $region12
      $region11: #{tpu_custom_call.1} parent=5 // pred_region
        %s138 = ssub.s32 %s16, 1
        // Predicated region
        $region13: #{tpu_custom_call.1} parent=11 // pred_check
          %p139 = pneg %p77
        $region14: #{tpu_custom_call.1} parent=11 // pred_check_branch
          %141 = sbr.rel (%p139) target = $region16
        $region15: #{tpu_custom_call.1} parent=11 // pred_region
          %143 = vsyncadd [#allocation7], 0
          %s145 = sshll.u32 %s1, 4
          %s146 = int_to_ptr.hbm [resolvable:$true] %s145
          %s147 = sshll.u32 [#allocation6], 4
          %s148 = int_to_ptr.vmem [resolvable:$true] %s147
          %150 = dma.hbm_to_vmem [thread:$0]  %s146, 128, %s148, [#allocation7]
        $region16: #{tpu_custom_call.1} parent=11 // pred_fallthru
          _
        // Predicated region
        $region17: #{tpu_custom_call.1} parent=11 // pred_check
          %p151 = pneg %p98
        $region18: #{tpu_custom_call.1} parent=11 // pred_check_branch
          %153 = sbr.rel (%p151) target = $region20
        $region19: #{tpu_custom_call.1} parent=11 // pred_region
          _
        $region20: #{tpu_custom_call.1} parent=11 // pred_fallthru
          _
      $region12: #{tpu_custom_call.1} parent=5 // pred_fallthru
        _
      %p154 = scmp.lt.s32.totalorder %s16, 2
      // Predicated region
      $region21: #{tpu_custom_call.1} parent=5 // pred_check
        %p155 = pneg %p154
      $region22: #{tpu_custom_call.1} parent=5 // pred_check_branch
        %157 = sbr.rel (%p155) target = $region24
      $region23: #{tpu_custom_call.1} parent=5 // pred_region
        // Predicated region
        $region25: #{tpu_custom_call.1} parent=23 // pred_check
          %p158 = pneg %p50
        $region26: #{tpu_custom_call.1} parent=23 // pred_check_branch
          %160 = sbr.rel (%p158) target = $region28
        $region27: #{tpu_custom_call.1} parent=23 // pred_region
          %s161 = sand.u32 %s40, 1
          %s162 = scalar_lea.sflag [#allocation4], %s161
          %s163 = sand.u32 %s40, 1
          %s164 = smul.addr %s163, 8
          %s165 = scalar_lea.vmem [#allocation3], %s164
          %167 = vsyncadd %s162, 0
          %s168 = sadd.s32 %s24, %s23
          %s169 = smul.addr %s168, 8
          %s170 = scalar_lea.hbm %s0, %s169
          %s172 = sshll.u32 %s170, 4
          %s173 = int_to_ptr.hbm [resolvable:$true] %s172
          %s174 = sshll.u32 %s165, 4
          %s175 = int_to_ptr.vmem [resolvable:$true] %s174
          %177 = dma.hbm_to_vmem [thread:$0]  %s173, 128, %s175, %s162
        $region28: #{tpu_custom_call.1} parent=23 // pred_fallthru
          _
      $region24: #{tpu_custom_call.1} parent=5 // pred_fallthru
        _
      %p178 = scmp.le.s32.totalorder 1, %s16
      %p179 = scmp.lt.s32.totalorder %s16, 3
      %p180 = pnand %p178, %p179
      %p181 = pneg %p180
      // Predicated region
      $region29: #{tpu_custom_call.1} parent=5 // pred_check
        _
      $region30: #{tpu_custom_call.1} parent=5 // pred_check_branch
        %183 = sbr.rel (%p180) target = $region32
      $region31: #{tpu_custom_call.1} parent=5 // pred_region
        %s184 = ssub.s32 %s16, 1
        %s185 = sand.u32 %s43, 1
        %s186 = scalar_lea.sflag [#allocation4], %s185
        %s187 = sand.u32 %s43, 1
        %s188 = smul.addr %s187, 8
        %s189 = scalar_lea.vmem [#allocation3], %s188
        // Predicated region
        $region33: #{tpu_custom_call.1} parent=31 // pred_check
          %p190 = pneg %p56
        $region34: #{tpu_custom_call.1} parent=31 // pred_check_branch
          %192 = sbr.rel (%p190) target = $region36
        $region35: #{tpu_custom_call.1} parent=31 // pred_region
          %194 = dma.done %s186, 128
        $region36: #{tpu_custom_call.1} parent=31 // pred_fallthru
          _
        // Predicated region
        $region37: #{tpu_custom_call.1} parent=31 // pred_check
          %p195 = pneg %p77
        $region38: #{tpu_custom_call.1} parent=31 // pred_check_branch
          %197 = sbr.rel (%p195) target = $region40
        $region39: #{tpu_custom_call.1} parent=31 // pred_region
          %199 = dma.done [#allocation7], 128
        $region40: #{tpu_custom_call.1} parent=31 // pred_fallthru
          _
        %s200 = sand.u32 %s43, 1
        %s201 = scalar_lea.sflag [#allocation4], %s200
        %s202 = sand.u32 %s43, 1
        %s203 = smul.addr %s202, 8
        %s204 = scalar_lea.vmem [#allocation3], %s203
        %p205 = pneg %p56
        %p206 = pneg %p53
        %p207 = pneg %p77
        %p208 = pneg %p74
        %p209 = pneg %p98
        %p210 = pneg %p95
        %p211 = pneg %p124
        %p212 = pneg %p121
        %s213 = sand.u32 %s111, 1
        %s214 = scalar_lea.sflag [#allocation5], %s213
        %s215 = sand.u32 %s111, 1
        %s216 = scalar_lea.vmem [#allocation8], %s215
        %p217 = scmp.eq.s32.totalorder %s26, 0
        // Predicated region
        $region41: #{tpu_custom_call.1} parent=31 // pred_check
          %p218 = pneg %p217
        $region42: #{tpu_custom_call.1} parent=31 // pred_check_branch
          %220 = sbr.rel (%p218) target = $region44
        $region43: #{tpu_custom_call.1} parent=31 // pred_region
          %221 = vst [vmem:[#allocation2] sm:$0xff] 0.0
        $region44: #{tpu_custom_call.1} parent=31 // pred_fallthru
          _
        %v222 = vld [vmem:[#allocation2] sm:$0xff]
        %v223 = vld [vmem:[%s189] sm:$0xff]
        %v224 = vadd.f32 %v222, %v223
        %225 = vst [vmem:[#allocation2] sm:$0xff] %v224
        // Predicated region
        $region45: #{tpu_custom_call.1} parent=31 // pred_check
          %p226 = pneg %p217
        $region46: #{tpu_custom_call.1} parent=31 // pred_check_branch
          %228 = sbr.rel (%p226) target = $region48
        $region47: #{tpu_custom_call.1} parent=31 // pred_region
          %v229 = vld [vmem:[#allocation2] sm:$0xff]
          %230 = vadd.xlane.f32.xlu0 %v229
          %v231 = vpop.xlane.xlu0 %230
          %v232 = vld [vmem:[#allocation6] sm:$0xff]
          %v233 = vld [vmem:[%s2] sm:$0x1]
          %v235 = vlaneseq
          %v236 = vand.u32 %v235, 127
          %v237 = vperm.slane %v231, %v236
          %vm238 = vcmask 64512
          %v239 = vsel %vm238, %v237, 0
          %241 = vmatpush.msra.mxu0 0.0
          %242 = vmatpush.msra.mxu0 0.0
          %243 = vmatpush.msra.mxu0 0.0
          %244 = vmatpush.msra.mxu0 0.0
          %245 = vmatpush.msra.mxu0 0.0
          %246 = vmatpush.msra.mxu0 0.0
          %247 = vmatpush.msra.mxu0 0.0
          %248 = vmatpush.msra.mxu0 0.0
          %249 = vmatpush.msra.mxu0 0.0
          %250 = vmatpush.msra.mxu0 0.0
          %251 = vmatpush.msra.mxu0 0.0
          %252 = vmatpush.msra.mxu0 0.0
          %253 = vmatpush.msra.mxu0 0.0
          %254 = vmatpush.msra.mxu0 0.0
          %255 = vmatpush.msra.mxu0 0.0
          %256 = vmatpush.msra.mxu0 %v232
          %257 = vmatmul.f32.gmra.mxu0 %v239
          %v258 = vpop.f32.mrf.mxu0
          %v259 = vadd.f32 %v233, %v258
          %260 = vdwg.mxu0
          %vm261 = vcmask 57344
          %262 = vst.msk [vmem:[%s216] sm:$0x1] %vm261, %v259
        $region48: #{tpu_custom_call.1} parent=31 // pred_fallthru
          _
        %s263 = sand.u32 %s111, 1
        %s264 = scalar_lea.sflag [#allocation5], %s263
        %s265 = sand.u32 %s111, 1
        %s266 = scalar_lea.vmem [#allocation8], %s265
        // Predicated region
        $region49: #{tpu_custom_call.1} parent=31 // pred_check
          %p267 = pneg %p121
        $region50: #{tpu_custom_call.1} parent=31 // pred_check_branch
          %269 = sbr.rel (%p267) target = $region52
        $region51: #{tpu_custom_call.1} parent=31 // pred_region
          %271 = vsyncadd %s264, 0
          %s272 = scalar_lea.hbm %s3, %s25
          %s274 = sshll.u32 %s266, 4
          %s275 = int_to_ptr.vmem [resolvable:$true] %s274
          %s276 = sshll.u32 %s272, 4
          %s277 = int_to_ptr.hbm [resolvable:$true] %s276
          %279 = dma.vmem_to_hbm [thread:$0]  %s275, 16, %s277, %s264
        $region52: #{tpu_custom_call.1} parent=31 // pred_fallthru
          _
      $region32: #{tpu_custom_call.1} parent=5 // pred_fallthru
        _
      %p280 = scmp.le.s32.totalorder 2, %s16
      // Predicated region
      $region53: #{tpu_custom_call.1} parent=5 // pred_check
        %p281 = pneg %p280
      $region54: #{tpu_custom_call.1} parent=5 // pred_check_branch
        %283 = sbr.rel (%p281) target = $region56
      $region55: #{tpu_custom_call.1} parent=5 // pred_region
        %s284 = ssub.s32 %s16, 2
        // Predicated region
        $region57: #{tpu_custom_call.1} parent=55 // pred_check
          %p285 = pneg %p127
        $region58: #{tpu_custom_call.1} parent=55 // pred_check_branch
          %287 = sbr.rel (%p285) target = $region60
        $region59: #{tpu_custom_call.1} parent=55 // pred_region
          %s288 = sand.u32 %s112, 1
          %s289 = scalar_lea.sflag [#allocation5], %s288
          %s290 = sand.u32 %s112, 1
          %s291 = scalar_lea.vmem [#allocation8], %s290
          %293 = dma.done %s289, 16
        $region60: #{tpu_custom_call.1} parent=55 // pred_fallthru
          _
      $region56: #{tpu_custom_call.1} parent=5 // pred_fallthru
        _
    $region6: #{tpu_custom_call.1} parent=1 // loop_footer
      %s20 = sadd.s32 1, %s16
    $region7: #{tpu_custom_call.1} parent=1 // loop_footer_branch
      %15 = sbr.rel target = $region3
    $region8: #{tpu_custom_call.1} parent=1 // loop_exit
      _
    %294 = vsyncpa [#allocation4], 1
    %s295 = scalar_lea.sflag [#allocation4], 1
    %296 = vsyncpa %s295, 1
    %297 = vsyncpa [#allocation7], 1
    %298 = vsyncpa [#allocation5], 1
    %s299 = scalar_lea.sflag [#allocation5], 1
    %300 = vsyncpa %s299, 1

</llo_original>
